<compile_context>
chip_gen: v6e
topology: v6e:2x2x1
jax: 0.10.0
libtpu: 0.0.40
codegen_flags: <defaults>
</compile_context>

<pallas_src>
import functools

import jax
import jax.numpy as jnp
from jax import lax
from jax.experimental import pallas as pl
from jax.experimental.pallas import tpu as pltpu


# ---------------------------------------------------------------------------
# Kernels
# ---------------------------------------------------------------------------
def _gumbel_softmax_prng_kernel(seed_ref, z_ref, o_ref, *, inv_tau):
    """Soft gumbel-softmax along the vocab axis; Gumbel noise drawn in-kernel
    with the hardware PRNG (TPU backend only)."""
    # Mix (seed, i, j) as independent seed words -> decorrelated per-block
    # streams, no integer wrap-around.
    pltpu.prng_seed(seed_ref[0], pl.program_id(0), pl.program_id(1))

    z = z_ref[...].astype(jnp.float32)                        # (nb, C, T)
    # Uniform in [0, 1): random mantissa, exponent forced to 1.0 -> [1,2) - 1.
    bits = pltpu.bitcast(pltpu.prng_random_bits(z.shape), jnp.uint32)
    u = pltpu.bitcast((bits >> 9) | jnp.uint32(0x3F800000), jnp.float32) - 1.0
    u = jnp.maximum(u, jnp.float32(1e-20))                    # avoid log(0)
    g = -jnp.log(-jnp.log(u))                                 # standard Gumbel

    # Numerically stable softmax over the vocabulary axis (axis -2 here).
    y = (z + g) * inv_tau
    y = y - jnp.max(y, axis=-2, keepdims=True)
    e = jnp.exp(y)
    # Exact division: kernel is HBM-bound, so the exact form is wall-clock free.
    o_ref[...] = (e / jnp.sum(e, axis=-2, keepdims=True)).astype(o_ref.dtype)


def _gumbel_softmax_noise_kernel(z_ref, g_ref, o_ref, *, inv_tau):
    """Portable training path: Gumbel noise pre-generated on host.  Used
    off-TPU / interpret mode, where pltpu.prng_seed has no lowering rule."""
    y = (z_ref[...].astype(jnp.float32) + g_ref[...].astype(jnp.float32)) * inv_tau
    y = y - jnp.max(y, axis=-2, keepdims=True)
    e = jnp.exp(y)
    o_ref[...] = (e / jnp.sum(e, axis=-2, keepdims=True)).astype(o_ref.dtype)


def _argmax_onehot_kernel(z_ref, o_ref):
    """argmax over the vocab axis -> one-hot, first-index tie break
    (matches torch.argmax)."""
    z = z_ref[...].astype(jnp.float32)                        # (nb, C, T)
    c = z.shape[-2]
    m = jnp.max(z, axis=-2, keepdims=True)
    iota = lax.broadcasted_iota(jnp.int32, z.shape, z.ndim - 2)
    cand = jnp.where(z == m, iota, jnp.int32(c))
    idx = jnp.min(cand, axis=-2, keepdims=True)               # first max index
    o_ref[...] = (iota == idx).astype(o_ref.dtype)


# ---------------------------------------------------------------------------
# Tiling helpers
# ---------------------------------------------------------------------------
def _vmem_limit_bytes():
    """Generation-aware scoped-VMEM limit: half of physical VMEM, <= 64 MiB.
    (v5e/v6e: 128 MiB physical -> 64 MiB; v7x: 64 MiB physical -> 32 MiB.)"""
    try:
        cap = int(pltpu.get_tpu_info().vmem_capacity_bytes)
    except Exception:
        cap = 64 * 1024 * 1024          # conservative (v7x-sized) fallback
    return max(16 * 1024 * 1024, min(cap // 2, 64 * 1024 * 1024))


def _choose_blocks(n, c, hw_pad, budget_bytes, live_blocks):
    """Pick (nb, t): batch rows per block and lane tile (multiple of 128,
    dividing hw_pad) such that `live_blocks` live f32 copies of an (nb, c, t)
    block (double-buffered DMA buffers + kernel temporaries) fit the budget."""
    max_elems = max(budget_bytes // (4 * live_blocks), c * 128)

    # Largest lane tile that is a multiple of 128, divides hw_pad, and fits.
    t = 128
    cand = 128
    while cand <= hw_pad:
        if hw_pad % cand == 0 and c * cand <= max_elems:
            t = cand
        cand += 128

    # Grow the leading (batch) block dim while it still fits the budget.
    nb = 1
    for b in range(1, n + 1):
        if n % b == 0 and b * c * t <= max_elems:
            nb = b

    # v7x megacore: keep at least 2 grid programs so both TensorCores get work.
    if (n // nb) * (hw_pad // t) < 2:
        if nb > 1:
            for b in range(nb - 1, 0, -1):
                if n % b == 0:
                    nb = b
                    break
        elif t > 128:
            for lt in range(t - 128, 127, -128):
                if hw_pad % lt == 0:
                    t = lt
                    break
    return nb, t


# ---------------------------------------------------------------------------
# Wrapper
# ---------------------------------------------------------------------------
def token_sampler(z, *, tau=1.0, training=True, key=None, out_dtype=None):
    """JAX/Pallas equivalent of TokenSampler.forward.

    z: (N, C, H, W), C == vocabulary_size, reduction along dim=-3.
    Returns (N, C, H, W).  `out_dtype` (default: z.dtype) may be set to
    jnp.bfloat16 to cut HBM write traffic 25%; all math stays in f32.
    """
    n, c, h, w = z.shape
    hw = h * w
    if out_dtype is None:
        out_dtype = z.dtype

    # Flatten spatial dims: vocab on sublanes, long H*W axis dense on lanes,
    # padded to a 128 multiple so output stores are unmasked / lane-dense.
    z_flat = z.reshape(n, c, hw)
    hw_pad = ((hw + 127) // 128) * 128
    if hw_pad != hw:
        z_flat = jnp.pad(z_flat, ((0, 0), (0, 0), (0, hw_pad - hw)))

    vmem_limit = _vmem_limit_bytes()
    budget = (vmem_limit * 3) // 4
    nb, t = _choose_blocks(n, c, hw_pad, budget,
                           live_blocks=10 if training else 8)
    grid = (n // nb, hw_pad // t)
    # index_map receives (i, j) plus any scalar-prefetch refs -> absorb with *_.
    blk = pl.BlockSpec((nb, c, t), lambda i, j, *_: (i, 0, j))
    out_shape = jax.ShapeDtypeStruct((n, c, hw_pad), out_dtype)
    cparams = pltpu.CompilerParams(
        dimension_semantics=("parallel", "parallel"),
        vmem_limit_bytes=vmem_limit,
    )

    if training:
        if key is None:
            key = jax.random.PRNGKey(0)
        inv_tau = float(1.0 / tau)
        if jax.default_backend() == "tpu":
            # Gumbel noise drawn in-kernel with the HW PRNG: only z read from HBM.
            seed = jax.random.randint(
                key, (1,), 0, jnp.iinfo(jnp.int32).max, dtype=jnp.int32
            )
            out = pl.pallas_call(
                functools.partial(_gumbel_softmax_prng_kernel, inv_tau=inv_tau),
                out_shape=out_shape,
                grid_spec=pltpu.PrefetchScalarGridSpec(
                    num_scalar_prefetch=1,
                    grid=grid,
                    in_specs=[blk],
                    out_specs=blk,
                ),
                compiler_params=cparams,
            )(seed, z_flat)
        else:
            # Interpret / non-TPU fallback: pltpu.prng_seed has no CPU lowering,
            # so pre-generate the noise and stream it through the same pipeline.
            g = jax.random.gumbel(key, z_flat.shape, dtype=jnp.float32)
            out = pl.pallas_call(
                functools.partial(_gumbel_softmax_noise_kernel, inv_tau=inv_tau),
                out_shape=out_shape,
                grid=grid,
                in_specs=[blk, blk],
                out_specs=blk,
                compiler_params=cparams,
            )(z_flat, g)
    else:
        out = pl.pallas_call(
            _argmax_onehot_kernel,
            out_shape=out_shape,
            grid=grid,
            in_specs=[blk],
            out_specs=blk,
            compiler_params=cparams,
        )(z_flat)

    if hw_pad != hw:
        out = out[:, :, :hw]
    return out.reshape(n, c, h, w)


# ---------------------------------------------------------------------------
# Main
# ---------------------------------------------------------------------------
if __name__ == "__main__":
    key = jax.random.PRNGKey(0)
    k_z, k_g = jax.random.split(key)

    N, VOCAB, H, W = 2, 8, 16, 16          # vocabulary_size = 8
    tau = 1.0
    z = jax.random.normal(k_z, (N, VOCAB, H, W), dtype=jnp.float32)

    # training mode: soft gumbel-softmax samples
    y_train = jax.block_until_ready(token_sampler(z, tau=tau, training=True, key=k_g))

    # eval mode: hard one-hot of argmax over the vocabulary axis
    y_eval = jax.block_until_ready(token_sampler(z, tau=tau, training=False))

    # sanity checks
    assert y_train.shape == (N, VOCAB, H, W)
    assert y_eval.shape == (N, VOCAB, H, W)
    assert bool(jnp.all(jnp.isfinite(y_train)))
    assert jnp.allclose(jnp.sum(y_train, axis=1), 1.0, atol=1e-5)
    assert jnp.allclose(jnp.sum(y_eval, axis=1), 1.0, atol=1e-6)
    # eval path matches a pure-JAX reference exactly
    ref_eval = jax.nn.one_hot(jnp.argmax(z, axis=1), VOCAB, axis=1, dtype=jnp.float32)
    assert jnp.allclose(y_eval, ref_eval)

    print("KERNEL_OK")
</pallas_src>

<mosaic_0001>
module attributes {stable_mosaic.version = 11 : i64} {
  func.func @_gumbel_softmax_noise_kernel(%arg0: i32, %arg1: i32, %arg2: memref<1x8x256xf32, #tpu.memory_space<vmem>>, %arg3: memref<1x8x256xf32, #tpu.memory_space<vmem>>, %arg4: memref<1x8x256xf32, #tpu.memory_space<vmem>>) attributes {dimension_semantics = [#tpu.dimension_semantics<parallel>, #tpu.dimension_semantics<parallel>], iteration_bounds = array<i64: 2, 1>, scalar_prefetch = 0 : i64, scratch_operands = 0 : i64, tpu.core_type = #tpu.core_type<tc>, window_params = [{transform_indices = @transform_0, window_bounds = array<i64: 1, 8, 256>}, {transform_indices = @transform_1, window_bounds = array<i64: 1, 8, 256>}, {transform_indices = @transform_2, window_bounds = array<i64: 1, 8, 256>}]} {
    %c0 = arith.constant 0 : index
    %c0_0 = arith.constant 0 : index
    %c0_1 = arith.constant 0 : index
    %0 = vector.load %arg2[%c0, %c0_0, %c0_1] : memref<1x8x256xf32, #tpu.memory_space<vmem>>, vector<1x8x256xf32>
    %c0_2 = arith.constant 0 : index
    %c0_3 = arith.constant 0 : index
    %c0_4 = arith.constant 0 : index
    %1 = vector.load %arg3[%c0_2, %c0_3, %c0_4] : memref<1x8x256xf32, #tpu.memory_space<vmem>>, vector<1x8x256xf32>
    %2 = arith.addf %0, %1 : vector<1x8x256xf32>
    %cst = arith.constant 1.000000e+00 : f32
    %3 = vector.broadcast %cst : f32 to vector<1x8x256xf32>
    %4 = arith.mulf %2, %3 : vector<1x8x256xf32>
    %cst_5 = arith.constant dense<0xFF800000> : vector<1x256xf32>
    %5 = vector.multi_reduction <maximumf>, %4, %cst_5 [1] : vector<1x8x256xf32> to vector<1x256xf32>
    %6 = vector.shape_cast %5 : vector<1x256xf32> to vector<1x1x256xf32>
    %7 = vector.broadcast %6 : vector<1x1x256xf32> to vector<1x8x256xf32>
    %8 = arith.subf %4, %7 : vector<1x8x256xf32>
    %9 = math.exp %8 : vector<1x8x256xf32>
    %cst_6 = arith.constant dense<0.000000e+00> : vector<1x256xf32>
    %10 = vector.multi_reduction <add>, %9, %cst_6 [1] : vector<1x8x256xf32> to vector<1x256xf32>
    %11 = vector.shape_cast %10 : vector<1x256xf32> to vector<1x1x256xf32>
    %12 = vector.broadcast %11 : vector<1x1x256xf32> to vector<1x8x256xf32>
    %13 = arith.divf %9, %12 : vector<1x8x256xf32>
    %c0_7 = arith.constant 0 : index
    %c0_8 = arith.constant 0 : index
    %c0_9 = arith.constant 0 : index
    %14 = vector.load %arg4[%c0_7, %c0_8, %c0_9] : memref<1x8x256xf32, #tpu.memory_space<vmem>>, vector<1x8x256xf32>
    tpu.vector_store %arg4[%c0_7, %c0_8, %c0_9], %13 {strides = array<i32>} : memref<1x8x256xf32, #tpu.memory_space<vmem>>, vector<1x8x256xf32>,
    return
  }
  func.func @transform_0(%arg0: i32, %arg1: i32) -> (i32, i32, i32) {
    %c0_i32 = arith.constant 0 : i32
    %c0_i32_0 = arith.constant 0 : i32
    return %arg0, %c0_i32, %arg1 : i32, i32, i32
  }
  func.func @transform_1(%arg0: i32, %arg1: i32) -> (i32, i32, i32) {
    %c0_i32 = arith.constant 0 : i32
    %c0_i32_0 = arith.constant 0 : i32
    return %arg0, %c0_i32, %arg1 : i32, i32, i32
  }
  func.func @transform_2(%arg0: i32, %arg1: i32) -> (i32, i32, i32) {
    %c0_i32 = arith.constant 0 : i32
    %c0_i32_0 = arith.constant 0 : i32
    return %arg0, %c0_i32, %arg1 : i32, i32, i32
  }
}

</mosaic_0001>

<llo_original>
// kernel: tpu_custom_call.1
$region0: #{tpu_custom_call.1}
  #allocation0 [shape = 'u32[]', space=smem, size = 0x4, offset = 0x4, fixed_abs, tag = 'smem constant byte address 0x4 - core index']
  #allocation1 [shape = 'u32[144,128]{1,0:T(1,128)}', space=vmem, size = 0x12000, scoped, tag = 'internal scratch']
  %s0 = inlined_call_operand.hbm [shape: f32[2,8,256], index: 0, kind: input, shape index: {}]
  %s1 = inlined_call_operand.hbm [shape: f32[2,8,256], index: 1, kind: input, shape index: {}]
  %s2 = inlined_call_operand.hbm [shape: f32[2,8,256], index: 2, kind: output, shape index: {}]
  %s3 = sld [smem:[#allocation0]]
  $region49: #{tpu_custom_call.1} parent=0
    _
  %s5 = ssub.s32 1, %s3
  %s6 = scalar_select 0, %s5, %s3
  $region1: #{tpu_custom_call.1} parent=0
    #allocation2 [shape = 'u8[16384]{0}', space=vmem, size = 0x4000, scoped, tag = 'input window, operand 0']
    #allocation3 [shape = 's32[2]{0}', space=sflag, size = 0x8, scoped, tag = 'scoped memory for tpu_custom_call.1']
    #allocation4 [shape = 's32[2]{0}', space=sflag, size = 0x8, scoped, tag = 'scoped memory for tpu_custom_call.1']
    #allocation5 [shape = 'u8[16384]{0}', space=vmem, size = 0x4000, scoped, tag = 'input window, operand 1']
    #allocation6 [shape = 's32[2]{0}', space=sflag, size = 0x8, scoped, tag = 'scoped memory for tpu_custom_call.1']
    #allocation7 [shape = 'u8[16384]{0}', space=vmem, size = 0x4000, scoped, tag = 'output window, operand 0']
    %7 = vsyncpa [#allocation3], 0
    %s8 = scalar_lea.sflag [#allocation3], 1
    %9 = vsyncpa %s8, 0
    %10 = vsyncpa [#allocation6], 0
    %s11 = scalar_lea.sflag [#allocation6], 1
    %12 = vsyncpa %s11, 0
    %13 = vsyncpa [#allocation4], 0
    %s14 = scalar_lea.sflag [#allocation4], 1
    %15 = vsyncpa %s14, 0
    loop: start=0, step=1, limit=4
    $region2: #{tpu_custom_call.1} parent=1 // loop_pre_header
      _
    $region3: #{tpu_custom_call.1} parent=1 // loop_header
      %s17 = sphi 0, %s21
      %p18 = scmp.ge.s32.totalorder %s17, 4
      %s24 = sphi 0, %s36
      %s25 = sphi 0, %s32
      %s26 = sphi 0, %s24
      %s27 = sphi 0, %s25
      %s28 = sphi 0, %s26
      %s29 = sphi 0, %s27
      %s41 = sphi 0, %s43
      %s44 = sphi 0, %s41
      %s45 = sphi 0, %s44
      %s61 = sphi 0, %s45
      %s69 = sphi 0, %s71
      %s72 = sphi 0, %s69
      %s73 = sphi 0, %s72
      %s89 = sphi 0, %s73
      %s97 = sphi 0, %s99
      %s100 = sphi 0, %s97
      %s101 = sphi 0, %s100
      %s117 = sphi 0, %s101
    $region4: #{tpu_custom_call.1} parent=1 // loop_header_branch
      %20 = sbr.rel (%p18) target = $region8
    $region5: #{tpu_custom_call.1} parent=1 // loop_body
      %s22 = ssub.s32 %s17, 1
      %s23 = ssub.s32 %s17, 2
      %s30 = sadd.s32 1, %s25
      %p31 = scmp.ge.s32.totalorder %s30, 1
      %s32 = scalar_select %p31, 0, %s30
      %s33 = sadd.s32 1, %s24
      %s34 = scalar_select %p31, %s33, %s24
      %p35 = scmp.ge.s32.totalorder %s34, 2
      %s36 = scalar_select %p35, 0, %s34
      %s37 = ssub.s32 %s24, %s36
      %s38 = ssub.s32 %s25, %s32
      %s39 = sor.u32 %s37, %s38
      %p40 = scmp.eq.s32.totalorder %s39, 0
      %s42 = sadd.s32 %s41, 1
      %s43 = scalar_select %p40, %s41, %s42
      %p46 = pneg %p40
      %p47 = scmp.eq.s32.totalorder %s17, 1
      %p48 = por %p46, %p47
      %p49 = scmp.ne.s32.totalorder %s41, %s44
      %p50 = scmp.eq.s32.totalorder %s17, 0
      %p51 = por %p49, %p50
      %p52 = scmp.ne.s32.totalorder %s41, %s44
      %p53 = scmp.eq.s32.totalorder %s22, 1
      %p54 = por %p52, %p53
      %p55 = scmp.ne.s32.totalorder %s44, %s45
      %p56 = scmp.eq.s32.totalorder %s22, 0
      %p57 = por %p55, %p56
      %p58 = scmp.ne.s32.totalorder %s44, %s45
      %p59 = scmp.eq.s32.totalorder %s23, 1
      %p60 = por %p58, %p59
      %p62 = scmp.ne.s32.totalorder %s45, %s61
      %p63 = scmp.eq.s32.totalorder %s23, 0
      %p64 = por %p62, %p63
      %s65 = ssub.s32 %s24, %s36
      %s66 = ssub.s32 %s25, %s32
      %s67 = sor.u32 %s65, %s66
      %p68 = scmp.eq.s32.totalorder %s67, 0
      %s70 = sadd.s32 %s69, 1
      %s71 = scalar_select %p68, %s69, %s70
      %p74 = pneg %p68
      %p75 = scmp.eq.s32.totalorder %s17, 1
      %p76 = por %p74, %p75
      %p77 = scmp.ne.s32.totalorder %s69, %s72
      %p78 = scmp.eq.s32.totalorder %s17, 0
      %p79 = por %p77, %p78
      %p80 = scmp.ne.s32.totalorder %s69, %s72
      %p81 = scmp.eq.s32.totalorder %s22, 1
      %p82 = por %p80, %p81
      %p83 = scmp.ne.s32.totalorder %s72, %s73
      %p84 = scmp.eq.s32.totalorder %s22, 0
      %p85 = por %p83, %p84
      %p86 = scmp.ne.s32.totalorder %s72, %s73
      %p87 = scmp.eq.s32.totalorder %s23, 1
      %p88 = por %p86, %p87
      %p90 = scmp.ne.s32.totalorder %s73, %s89
      %p91 = scmp.eq.s32.totalorder %s23, 0
      %p92 = por %p90, %p91
      %s93 = ssub.s32 %s24, %s36
      %s94 = ssub.s32 %s25, %s32
      %s95 = sor.u32 %s93, %s94
      %p96 = scmp.eq.s32.totalorder %s95, 0
      %s98 = sadd.s32 %s97, 1
      %s99 = scalar_select %p96, %s97, %s98
      %p102 = pneg %p96
      %p103 = scmp.eq.s32.totalorder %s17, 1
      %p104 = por %p102, %p103
      %p105 = scmp.ne.s32.totalorder %s97, %s100
      %p106 = scmp.eq.s32.totalorder %s17, 0
      %p107 = por %p105, %p106
      %p108 = scmp.ne.s32.totalorder %s97, %s100
      %p109 = scmp.eq.s32.totalorder %s22, 1
      %p110 = por %p108, %p109
      %p111 = scmp.ne.s32.totalorder %s100, %s101
      %p112 = scmp.eq.s32.totalorder %s22, 0
      %p113 = por %p111, %p112
      %p114 = scmp.ne.s32.totalorder %s100, %s101
      %p115 = scmp.eq.s32.totalorder %s23, 1
      %p116 = por %p114, %p115
      %p118 = scmp.ne.s32.totalorder %s101, %s117
      %p119 = scmp.eq.s32.totalorder %s23, 0
      %p120 = por %p118, %p119
      %p121 = scmp.le.s32.totalorder 1, %s17
      %p122 = scmp.lt.s32.totalorder %s17, 3
      %p123 = pnand %p121, %p122
      %p124 = pneg %p123
      // Predicated region
      $region9: #{tpu_custom_call.1} parent=5 // pred_check
        _
      $region10: #{tpu_custom_call.1} parent=5 // pred_check_branch
        %126 = sbr.rel (%p123) target = $region12
      $region11: #{tpu_custom_call.1} parent=5 // pred_region
        %s127 = ssub.s32 %s17, 1
      $region12: #{tpu_custom_call.1} parent=5 // pred_fallthru
        _
      %p128 = scmp.lt.s32.totalorder %s17, 2
      // Predicated region
      $region13: #{tpu_custom_call.1} parent=5 // pred_check
        %p129 = pneg %p128
      $region14: #{tpu_custom_call.1} parent=5 // pred_check_branch
        %131 = sbr.rel (%p129) target = $region16
      $region15: #{tpu_custom_call.1} parent=5 // pred_region
        // Predicated region
        $region17: #{tpu_custom_call.1} parent=15 // pred_check
          %p132 = pneg %p51
        $region18: #{tpu_custom_call.1} parent=15 // pred_check_branch
          %134 = sbr.rel (%p132) target = $region20
        $region19: #{tpu_custom_call.1} parent=15 // pred_region
          %s135 = sand.u32 %s41, 1
          %s136 = scalar_lea.sflag [#allocation3], %s135
          %s137 = sand.u32 %s41, 1
          %s138 = smul.addr %s137, 16
          %s139 = scalar_lea.vmem [#allocation2], %s138
          %s140 = smul.u32 2, %s25
          %s142 = ssub.s32 256, 256
          %143 = vsyncadd %s136, %s142
          %s144 = smul.addr %s24, 2
          %s145 = sadd.s32 %s140, %s144
          %s146 = smul.addr %s145, 128
          %s147 = scalar_lea.hbm %s0, %s146
          %s149 = sshll.u32 %s139, 4
          %s150 = int_to_ptr.vmem [resolvable:$true] %s149
          %152 = dma.hbm_to_vmem [thread:$0]  %s147, 256, %s150, %s136
        $region20: #{tpu_custom_call.1} parent=15 // pred_fallthru
          _
        // Predicated region
        $region21: #{tpu_custom_call.1} parent=15 // pred_check
          %p153 = pneg %p79
        $region22: #{tpu_custom_call.1} parent=15 // pred_check_branch
          %155 = sbr.rel (%p153) target = $region24
        $region23: #{tpu_custom_call.1} parent=15 // pred_region
          %s156 = sand.u32 %s69, 1
          %s157 = scalar_lea.sflag [#allocation6], %s156
          %s158 = sand.u32 %s69, 1
          %s159 = smul.addr %s158, 16
          %s160 = scalar_lea.vmem [#allocation5], %s159
          %s161 = smul.u32 2, %s25
          %s163 = ssub.s32 256, 256
          %164 = vsyncadd %s157, %s163
          %s165 = smul.addr %s24, 2
          %s166 = sadd.s32 %s161, %s165
          %s167 = smul.addr %s166, 128
          %s168 = scalar_lea.hbm %s1, %s167
          %s170 = sshll.u32 %s160, 4
          %s171 = int_to_ptr.vmem [resolvable:$true] %s170
          %173 = dma.hbm_to_vmem [thread:$0]  %s168, 256, %s171, %s157
        $region24: #{tpu_custom_call.1} parent=15 // pred_fallthru
          _
      $region16: #{tpu_custom_call.1} parent=5 // pred_fallthru
        _
      %p174 = scmp.le.s32.totalorder 1, %s17
      %p175 = scmp.lt.s32.totalorder %s17, 3
      %p176 = pnand %p174, %p175
      %p177 = pneg %p176
      // Predicated region
      $region25: #{tpu_custom_call.1} parent=5 // pred_check
        _
      $region26: #{tpu_custom_call.1} parent=5 // pred_check_branch
        %179 = sbr.rel (%p176) target = $region28
      $region27: #{tpu_custom_call.1} parent=5 // pred_region
        %s180 = ssub.s32 %s17, 1
        %s181 = sand.u32 %s44, 1
        %s182 = scalar_lea.sflag [#allocation3], %s181
        %s183 = sand.u32 %s44, 1
        %s184 = smul.addr %s183, 16
        %s185 = scalar_lea.vmem [#allocation2], %s184
        // Predicated region
        $region29: #{tpu_custom_call.1} parent=27 // pred_check
          %p186 = pneg %p57
        $region30: #{tpu_custom_call.1} parent=27 // pred_check_branch
          %188 = sbr.rel (%p186) target = $region32
        $region31: #{tpu_custom_call.1} parent=27 // pred_region
          %189 = dma.done %s182, 256
        $region32: #{tpu_custom_call.1} parent=27 // pred_fallthru
          _
        %s190 = sand.u32 %s72, 1
        %s191 = scalar_lea.sflag [#allocation6], %s190
        %s192 = sand.u32 %s72, 1
        %s193 = smul.addr %s192, 16
        %s194 = scalar_lea.vmem [#allocation5], %s193
        // Predicated region
        $region33: #{tpu_custom_call.1} parent=27 // pred_check
          %p195 = pneg %p85
        $region34: #{tpu_custom_call.1} parent=27 // pred_check_branch
          %197 = sbr.rel (%p195) target = $region36
        $region35: #{tpu_custom_call.1} parent=27 // pred_region
          %198 = dma.done %s191, 256
        $region36: #{tpu_custom_call.1} parent=27 // pred_fallthru
          _
        %s199 = sand.u32 %s44, 1
        %s200 = scalar_lea.sflag [#allocation3], %s199
        %s201 = sand.u32 %s44, 1
        %s202 = smul.addr %s201, 16
        %s203 = scalar_lea.vmem [#allocation2], %s202
        %p204 = pneg %p57
        %p205 = pneg %p54
        %s206 = sand.u32 %s72, 1
        %s207 = scalar_lea.sflag [#allocation6], %s206
        %s208 = sand.u32 %s72, 1
        %s209 = smul.addr %s208, 16
        %s210 = scalar_lea.vmem [#allocation5], %s209
        %p211 = pneg %p85
        %p212 = pneg %p82
        %p213 = pneg %p113
        %p214 = pneg %p110
        %s215 = sand.u32 %s100, 1
        %s216 = scalar_lea.sflag [#allocation4], %s215
        %s217 = sand.u32 %s100, 1
        %s218 = smul.addr %s217, 16
        %s219 = scalar_lea.vmem [#allocation7], %s218
        %s220 = smul.u32 2, %s27
        %s221 = smul.u32 2, %s27
        %s222 = smul.u32 2, %s27
        %v223 = vld [vmem:[%s185] sm:$0xff]
        %v224 = vld [vmem:[%s185 + $0x8] sm:$0xff]
        %v225 = vld [vmem:[%s194] sm:$0xff]
        %v226 = vld [vmem:[%s194 + $0x8] sm:$0xff]
        %v227 = vadd.f32 %v223, %v225
        %v228 = vadd.f32 %v224, %v226
        %v229 = vrot.slane %v227, 4
        %v230 = vmax.f32 %v227, %v229
        %v231 = vrot.slane %v230, 2
        %v232 = vmax.f32 %v230, %v231
        %v233 = vrot.slane %v232, 1
        %v234 = vmax.f32 %v232, %v233
        %v235 = vrot.slane %v228, 4
        %v236 = vmax.f32 %v228, %v235
        %v237 = vrot.slane %v236, 2
        %v238 = vmax.f32 %v236, %v237
        %v239 = vrot.slane %v238, 1
        %v240 = vmax.f32 %v238, %v239
        %v241 = vsub.f32 %v227, %v234
        %v242 = vsub.f32 %v228, %v240
        %v243 = vmul.f32 %v241, 1.442695
        %v244 = vpow.pop %v243
        %v245 = vmul.f32 %v242, 1.442695
        %v246 = vpow.pop %v245
        %v247 = vrot.slane %v244, 4
        %v248 = vadd.f32 %v244, %v247
        %v249 = vrot.slane %v248, 2
        %v250 = vadd.f32 %v248, %v249
        %v251 = vrot.slane %v250, 1
        %v252 = vadd.f32 %v250, %v251
        %v253 = vrot.slane %v246, 4
        %v254 = vadd.f32 %v246, %v253
        %v255 = vrot.slane %v254, 2
        %v256 = vadd.f32 %v254, %v255
        %v257 = vrot.slane %v256, 1
        %v258 = vadd.f32 %v256, %v257
        %v259 = vrcp.pop %v252
        %v260 = vmul.f32 %v244, %v259
        %v261 = vrcp.pop %v258
        %v262 = vmul.f32 %v246, %v261
        %263 = vst [vmem:[%s219] sm:$0xff] %v260
        %264 = vst [vmem:[%s219 + $0x8] sm:$0xff] %v262
        %s265 = sand.u32 %s100, 1
        %s266 = scalar_lea.sflag [#allocation4], %s265
        %s267 = sand.u32 %s100, 1
        %s268 = smul.addr %s267, 16
        %s269 = scalar_lea.vmem [#allocation7], %s268
        // Predicated region
        $region37: #{tpu_custom_call.1} parent=27 // pred_check
          %p270 = pneg %p110
        $region38: #{tpu_custom_call.1} parent=27 // pred_check_branch
          %272 = sbr.rel (%p270) target = $region40
        $region39: #{tpu_custom_call.1} parent=27 // pred_region
          %s273 = smul.u32 2, %s27
          %s275 = ssub.s32 256, 256
          %276 = vsyncadd %s266, %s275
          %s277 = smul.addr %s26, 2
          %s278 = sadd.s32 %s273, %s277
          %s279 = smul.addr %s278, 128
          %s280 = scalar_lea.hbm %s2, %s279
          %s282 = sshll.u32 %s269, 4
          %s283 = int_to_ptr.vmem [resolvable:$true] %s282
          %285 = dma.vmem_to_hbm [thread:$0]  %s283, 256, %s280, %s266
        $region40: #{tpu_custom_call.1} parent=27 // pred_fallthru
          _
      $region28: #{tpu_custom_call.1} parent=5 // pred_fallthru
        _
      %p286 = scmp.le.s32.totalorder 2, %s17
      // Predicated region
      $region41: #{tpu_custom_call.1} parent=5 // pred_check
        %p287 = pneg %p286
      $region42: #{tpu_custom_call.1} parent=5 // pred_check_branch
        %289 = sbr.rel (%p287) target = $region44
      $region43: #{tpu_custom_call.1} parent=5 // pred_region
        %s290 = ssub.s32 %s17, 2
        // Predicated region
        $region45: #{tpu_custom_call.1} parent=43 // pred_check
          %p291 = pneg %p116
        $region46: #{tpu_custom_call.1} parent=43 // pred_check_branch
          %293 = sbr.rel (%p291) target = $region48
        $region47: #{tpu_custom_call.1} parent=43 // pred_region
          %s294 = sand.u32 %s101, 1
          %s295 = scalar_lea.sflag [#allocation4], %s294
          %s296 = sand.u32 %s101, 1
          %s297 = smul.addr %s296, 16
          %s298 = scalar_lea.vmem [#allocation7], %s297
          %299 = dma.done %s295, 256
        $region48: #{tpu_custom_call.1} parent=43 // pred_fallthru
          _
      $region44: #{tpu_custom_call.1} parent=5 // pred_fallthru
        _
    $region6: #{tpu_custom_call.1} parent=1 // loop_footer
      %s21 = sadd.s32 1, %s17
    $region7: #{tpu_custom_call.1} parent=1 // loop_footer_branch
      %16 = sbr.rel target = $region3
    $region8: #{tpu_custom_call.1} parent=1 // loop_exit
      _
    %300 = vsyncpa [#allocation3], 1
    %s301 = scalar_lea.sflag [#allocation3], 1
    %302 = vsyncpa %s301, 1
    %303 = vsyncpa [#allocation6], 1
    %s304 = scalar_lea.sflag [#allocation6], 1
    %305 = vsyncpa %s304, 1
    %306 = vsyncpa [#allocation4], 1
    %s307 = scalar_lea.sflag [#allocation4], 1
    %308 = vsyncpa %s307, 1

</llo_original>
